<compile_context>
chip_gen: v5e
topology: v5e:2x2
jax: 0.10.0
libtpu: 0.0.40
codegen_flags: <defaults>
</compile_context>

<pallas_src>
import jax
import jax.numpy as jnp
from jax.experimental import pallas as pl
from jax.experimental.pallas import tpu as pltpu

_LANE = 128
_SUBLANE = 8


def _identity_kernel(x_ref, o_ref):
    # The entire "forward" of NoAugment: o = x.
    o_ref[...] = x_ref[...]


def no_augment(x: jax.Array) -> jax.Array:
    """Identity forward pass of NoAugment, routed through a Pallas kernel.

    Note: if the surrounding program can tolerate buffer aliasing (input
    donated), the zero-cost identity is simply `return x` /
    input_output_aliases={0: 0}; this function performs an explicit,
    bandwidth-optimal tiled copy instead so the Pallas kernel is exercised
    and the caller keeps an independent output buffer.
    """
    if x.size == 0:
        return x  # nothing to do for empty inputs

    orig_shape = x.shape
    dtype = x.dtype
    itemsize = jnp.dtype(dtype).itemsize
    n = x.size
    flat = x.reshape(-1)

    # Pick the widest lane-dense row width W (multiple of 128) that divides n
    # while keeping at least 8 rows (full sublane occupancy).  Otherwise pad
    # the flat array up to an (8*128)-aligned size and use W = 128.
    W = None
    for cand in (2048, 1024, 512, 256, 128):
        if n % cand == 0 and n // cand >= _SUBLANE:
            W = cand
            break
    if W is None:
        W = _LANE
        align = _SUBLANE * _LANE
        n_eff = ((n + align - 1) // align) * align
        if n_eff != n:
            flat = jnp.pad(flat, (0, n_eff - n))
    else:
        n_eff = n

    rows = n_eff // W
    x2d = flat.reshape(rows, W)

    # Tile rows so each block is ~1 MiB: big enough to amortize the ~0.35 us
    # per-grid-step overhead, small enough that 2x double-buffered input +
    # output (4 buffers) stays far below every generation's scoped VMEM.
    target_block_bytes = 1 << 20  # 1 MiB
    tile_r = (target_block_bytes // (W * itemsize)) // _SUBLANE * _SUBLANE
    tile_r = max(_SUBLANE, tile_r)
    if tile_r >= rows:
        tile_r = rows  # single block; block_shape == full array is legal
    grid = (pl.cdiv(rows, tile_r),)

    out2d = pl.pallas_call(
        _identity_kernel,
        out_shape=jax.ShapeDtypeStruct((rows, W), dtype),
        grid=grid,
        in_specs=[pl.BlockSpec((tile_r, W), lambda i: (i, 0))],
        out_specs=pl.BlockSpec((tile_r, W), lambda i: (i, 0)),
        compiler_params=pltpu.CompilerParams(
            dimension_semantics=("parallel",)),
        cost_estimate=pl.CostEstimate(
            flops=0,
            transcendentals=0,
            bytes_accessed=2 * n_eff * itemsize),
    )(x2d)

    out_flat = out2d.reshape(-1)
    if n_eff != n:
        out_flat = out_flat[:n]
    return out_flat.reshape(orig_shape)


if __name__ == "__main__":
    key = jax.random.PRNGKey(0)
    # NCHW input, small shapes: batch=2, channels=4, spatial=16x16.
    x = jax.random.normal(key, (2, 4, 16, 16), dtype=jnp.float32)

    y = no_augment(x)
    y = jax.block_until_ready(y)

    assert y.shape == x.shape
    assert y.dtype == x.dtype
    assert bool(jnp.all(y == x))

    # Also exercise a ragged (non-multiple-of-128) size to cover the padded path.
    x2 = jax.random.normal(key, (3, 5, 7), dtype=jnp.bfloat16)
    y2 = jax.block_until_ready(no_augment(x2))
    assert y2.shape == x2.shape
    assert y2.dtype == x2.dtype
    assert bool(jnp.all(y2 == x2))

    print("KERNEL_OK")
</pallas_src>

<mosaic_0001>
module attributes {stable_mosaic.version = 11 : i64} {
  func.func @_identity_kernel(%arg0: i32, %arg1: memref<8x256xf32, #tpu.memory_space<vmem>>, %arg2: memref<8x256xf32, #tpu.memory_space<vmem>>) attributes {dimension_semantics = [#tpu.dimension_semantics<parallel>], iteration_bounds = array<i64: 1>, scalar_prefetch = 0 : i64, scratch_operands = 0 : i64, tpu.core_type = #tpu.core_type<tc>, window_params = [{transform_indices = @transform_0, window_bounds = array<i64: 8, 256>}, {transform_indices = @transform_1, window_bounds = array<i64: 8, 256>}]} {
    %c0 = arith.constant 0 : index
    %c0_0 = arith.constant 0 : index
    %0 = vector.load %arg1[%c0, %c0_0] : memref<8x256xf32, #tpu.memory_space<vmem>>, vector<8x256xf32>
    %c0_1 = arith.constant 0 : index
    %c0_2 = arith.constant 0 : index
    %1 = vector.load %arg2[%c0_1, %c0_2] : memref<8x256xf32, #tpu.memory_space<vmem>>, vector<8x256xf32>
    tpu.vector_store %arg2[%c0_1, %c0_2], %0 {strides = array<i32>} : memref<8x256xf32, #tpu.memory_space<vmem>>, vector<8x256xf32>,
    return
  }
  func.func @transform_0(%arg0: i32) -> (i32, i32) {
    %c0_i32 = arith.constant 0 : i32
    %c0_i32_0 = arith.constant 0 : i32
    return %arg0, %c0_i32 : i32, i32
  }
  func.func @transform_1(%arg0: i32) -> (i32, i32) {
    %c0_i32 = arith.constant 0 : i32
    %c0_i32_0 = arith.constant 0 : i32
    return %arg0, %c0_i32 : i32, i32
  }
}

</mosaic_0001>

<llo_original>
// kernel: tpu_custom_call.1
$region0: #{tpu_custom_call.1}
  #allocation0 [shape = 'u32[]', space=smem, size = 0x4, offset = 0x4, fixed_abs, tag = 'smem constant byte address 0x4 - core index']
  #allocation1 [shape = 'u32[72,128]{1,0:T(1,128)}', space=vmem, size = 0x9000, scoped, tag = 'internal scratch']
  %s0 = inlined_call_operand.hbm [shape: f32[8,256], index: 0, kind: input, shape index: {}]
  %s1 = inlined_call_operand.hbm [shape: f32[8,256], index: 1, kind: output, shape index: {}]
  %s2 = sld [smem:[#allocation0]]
  $region18: #{tpu_custom_call.1} parent=0
    _
  %s4 = ssub.s32 1, %s2
  %s5 = scalar_select 0, %s4, %s2
  $region1: #{tpu_custom_call.1} parent=0
    #allocation2 [shape = 'u8[8192]{0}', space=vmem, size = 0x2000, scoped, tag = 'input window, operand 0, single buffered']
    #allocation3 [shape = 's32[1]{0}', space=sflag, size = 0x4, scoped, tag = 'scoped memory for tpu_custom_call.1']
    #allocation4 [shape = 's32[1]{0}', space=sflag, size = 0x4, scoped, tag = 'scoped memory for tpu_custom_call.1']
    #allocation5 [shape = 'u8[8192]{0}', space=vmem, size = 0x2000, scoped, tag = 'output window, operand 0, single buffered']
    %6 = vsyncpa [#allocation3], 0
    %7 = vsyncpa [#allocation4], 0
    // Predicated region
    $region2: #{tpu_custom_call.1} parent=1 // pred_check
      _
    $region3: #{tpu_custom_call.1} parent=1 // pred_check_branch
      %9 = sbr.rel (0) target = $region5
    $region4: #{tpu_custom_call.1} parent=1 // pred_region
      %11 = vsyncadd [#allocation3], 0
      %s13 = sshll.u32 %s0, 4
      %s14 = int_to_ptr.hbm [resolvable:$true] %s13
      %s15 = sshll.u32 [#allocation2], 4
      %s16 = int_to_ptr.vmem [resolvable:$true] %s15
      %18 = dma.hbm_to_vmem [thread:$0]  %s14, 256, %s16, [#allocation3]
    $region5: #{tpu_custom_call.1} parent=1 // pred_fallthru
      _
    // Predicated region
    $region6: #{tpu_custom_call.1} parent=1 // pred_check
      _
    $region7: #{tpu_custom_call.1} parent=1 // pred_check_branch
      %20 = sbr.rel (0) target = $region9
    $region8: #{tpu_custom_call.1} parent=1 // pred_region
      %22 = dma.done [#allocation3], 256
    $region9: #{tpu_custom_call.1} parent=1 // pred_fallthru
      _
    %v23 = vld [vmem:[#allocation2] sm:$0xff]
    %v24 = vld [vmem:[#allocation2 + $0x8] sm:$0xff]
    %25 = vst [vmem:[#allocation5] sm:$0xff] %v23
    %26 = vst [vmem:[#allocation5 + $0x8] sm:$0xff] %v24
    // Predicated region
    $region10: #{tpu_custom_call.1} parent=1 // pred_check
      _
    $region11: #{tpu_custom_call.1} parent=1 // pred_check_branch
      %28 = sbr.rel (0) target = $region13
    $region12: #{tpu_custom_call.1} parent=1 // pred_region
      %30 = vsyncadd [#allocation4], 0
      %s32 = sshll.u32 [#allocation5], 4
      %s33 = int_to_ptr.vmem [resolvable:$true] %s32
      %s34 = sshll.u32 %s1, 4
      %s35 = int_to_ptr.hbm [resolvable:$true] %s34
      %37 = dma.vmem_to_hbm [thread:$0]  %s33, 256, %s35, [#allocation4]
    $region13: #{tpu_custom_call.1} parent=1 // pred_fallthru
      _
    // Predicated region
    $region14: #{tpu_custom_call.1} parent=1 // pred_check
      _
    $region15: #{tpu_custom_call.1} parent=1 // pred_check_branch
      %39 = sbr.rel (0) target = $region17
    $region16: #{tpu_custom_call.1} parent=1 // pred_region
      %41 = dma.done [#allocation4], 256
    $region17: #{tpu_custom_call.1} parent=1 // pred_fallthru
      _
    %42 = vsyncpa [#allocation3], 1
    %43 = vsyncpa [#allocation4], 1

</llo_original>
